<compile_context>
chip_gen: v5e
topology: v5e:2x2
jax: 0.10.0
libtpu: 0.0.40
codegen_flags: <defaults>
</compile_context>

<pallas_src>
import math

import jax
import jax.numpy as jnp
from jax.experimental import pallas as pl
from jax.experimental.pallas import tpu as pltpu

_CLAMP_MAX = 4.6052  # matches torch.clamp(self.t, 0, 4.6052)


def _exp_multiplier_kernel(t_ref, x_ref, o_ref):
    # t_ref: (1, 1) learned scalar in SMEM; x_ref / o_ref: VMEM tiles.
    scale = jnp.exp(jnp.clip(t_ref[0, 0], 0.0, _CLAMP_MAX))
    o_ref[...] = (x_ref[...].astype(jnp.float32) * scale).astype(o_ref.dtype)


def _min_sublane_rows(itemsize):
    # Sublane packing: f32 -> 8 rows/vreg, bf16 -> 16, int8/fp8 -> 32.
    return max(8, 32 // max(1, itemsize))


def _lane_dense_2d(x):
    """Return a 2-D view of x whose last dim is a multiple of 128 when a free
    (contiguous) reshape exists; otherwise fall back to the natural trailing axis."""
    total = x.size
    if x.ndim >= 2 and x.shape[-1] % 128 == 0:
        return x.reshape(-1, x.shape[-1])
    if total > 0:
        for w in (8192, 4096, 2048, 1024, 512, 256, 128):
            if total % w == 0:
                return x.reshape(total // w, w)
    # Narrow / odd total: keep the natural layout (may incur masked stores).
    return x.reshape(1, -1) if x.ndim <= 1 else x.reshape(-1, x.shape[-1])


def exp_multiplier_logit(x, t, *, block_bytes=4 << 20):
    """x: any-rank float array; t: scalar parameter. Returns x * exp(clip(t, 0, 4.6052))."""
    x = jnp.asarray(x)
    orig_shape = x.shape
    x2 = _lane_dense_2d(x)
    M, N = x2.shape
    itemsize = jnp.dtype(x2.dtype).itemsize
    min_rows = _min_sublane_rows(itemsize)
    t_arr = jnp.asarray(t, dtype=jnp.float32).reshape(1, 1)

    if M * N * itemsize <= block_bytes:
        # Whole array as one lane-dense block (the common case for CLIP-sized logits).
        grid = (1,)
        block = (M, N)
        idx_map = lambda i: (0, 0)
        t_idx = lambda i: (0, 0)
        sems = ("parallel",)
    elif N * itemsize * min_rows <= block_bytes:
        # 1-D grid over full-width row slabs: contiguous HBM DMAs, unmasked vst,
        # few grid steps.  tm is a multiple of the sublane pack for this dtype.
        tm = (block_bytes // (N * itemsize)) // min_rows * min_rows
        grid = (pl.cdiv(M, tm),)
        block = (tm, N)
        idx_map = lambda i: (i, 0)
        t_idx = lambda i: (0, 0)
        sems = ("parallel",)
    else:
        # Extremely wide rows: 2-D tiling, keep the lane dim a large multiple of 128.
        tn = max(128, (block_bytes // (min_rows * itemsize)) // 128 * 128)
        tm = M if M < min_rows else min_rows
        grid = (pl.cdiv(M, tm), pl.cdiv(N, tn))
        block = (tm, tn)
        idx_map = lambda i, j: (i, j)
        t_idx = lambda i, j: (0, 0)
        sems = ("parallel", "parallel")

    out2 = pl.pallas_call(
        _exp_multiplier_kernel,
        out_shape=jax.ShapeDtypeStruct((M, N), x2.dtype),
        grid_spec=pltpu.PrefetchScalarGridSpec(
            num_scalar_prefetch=0,
            grid=grid,
            in_specs=[
                pl.BlockSpec((1, 1), t_idx, memory_space=pltpu.SMEM),
                pl.BlockSpec(block, idx_map),
            ],
            out_specs=pl.BlockSpec(block, idx_map),
        ),
        compiler_params=pltpu.CompilerParams(
            dimension_semantics=sems,
            vmem_limit_bytes=32 << 20,
        ),
    )(t_arr, x2)
    return out2.reshape(orig_shape)


if __name__ == "__main__":
    # Deterministic parameter init, same as the PyTorch module's __init__.
    initial_value = 0.07
    t_param = jnp.float32(math.log(1.0 / initial_value))
    scale_ref = jnp.exp(jnp.clip(t_param, 0.0, _CLAMP_MAX))

    # CLIP-style similarity-logit matrix (img-batch x text-batch), small shape.
    key = jax.random.PRNGKey(0)
    x = jax.random.normal(key, (8, 32), dtype=jnp.float32)
    out = jax.block_until_ready(exp_multiplier_logit(x, t_param))
    assert out.shape == x.shape and out.dtype == x.dtype
    assert jnp.allclose(out, x * scale_ref, rtol=1e-6, atol=1e-6), "mismatch vs reference"

    # Exercise the multi-block row-slab path (tiny block budget, non-divisible rows).
    x2 = jax.random.normal(jax.random.PRNGKey(1), (100, 256), dtype=jnp.float32)
    out2 = jax.block_until_ready(
        exp_multiplier_logit(x2, t_param, block_bytes=32 * 1024)
    )
    assert jnp.allclose(out2, x2 * scale_ref, rtol=1e-6, atol=1e-6), "tiled mismatch"

    # bf16 input with a narrow last dim (exercises the lane-dense repack path).
    x3 = jax.random.normal(jax.random.PRNGKey(2), (6, 64), dtype=jnp.bfloat16)
    out3 = jax.block_until_ready(exp_multiplier_logit(x3, t_param))
    assert out3.dtype == jnp.bfloat16
    assert jnp.allclose(
        out3.astype(jnp.float32),
        (x3.astype(jnp.float32) * scale_ref).astype(jnp.bfloat16).astype(jnp.float32),
        rtol=2e-2, atol=2e-2,
    ), "bf16 mismatch"

    print("KERNEL_OK")
</pallas_src>

<mosaic_0001>
module attributes {stable_mosaic.version = 11 : i64} {
  func.func @_exp_multiplier_kernel(%arg0: i32, %arg1: memref<1x1xf32, #tpu.memory_space<smem>>, %arg2: memref<1x256xf32, #tpu.memory_space<vmem>>, %arg3: memref<1x256xf32, #tpu.memory_space<vmem>>) attributes {dimension_semantics = [#tpu.dimension_semantics<parallel>], iteration_bounds = array<i64: 1>, scalar_prefetch = 0 : i64, scratch_operands = 0 : i64, tpu.core_type = #tpu.core_type<tc>, window_params = [{transform_indices = @transform_0, window_bounds = array<i64: 1, 1>}, {pipeline_mode = #tpu.pipeline_mode<synchronous>, transform_indices = @transform_1, window_bounds = array<i64: 1, 256>}, {pipeline_mode = #tpu.pipeline_mode<synchronous>, transform_indices = @transform_2, window_bounds = array<i64: 1, 256>}]} {
    %c0 = arith.constant 0 : index
    %c0_0 = arith.constant 0 : index
    %0 = memref.load %arg1[%c0, %c0_0] : memref<1x1xf32, #tpu.memory_space<smem>>
    %cst = arith.constant 0.000000e+00 : f32
    %cst_1 = arith.constant 4.605200e+00 : f32
    %1 = arith.maximumf %cst, %0 : f32
    %2 = arith.minimumf %cst_1, %1 : f32
    %3 = math.exp %2 : f32
    %c0_2 = arith.constant 0 : index
    %c0_3 = arith.constant 0 : index
    %4 = vector.load %arg2[%c0_2, %c0_3] : memref<1x256xf32, #tpu.memory_space<vmem>>, vector<1x256xf32>
    %5 = vector.broadcast %3 : f32 to vector<1x256xf32>
    %6 = arith.mulf %4, %5 : vector<1x256xf32>
    %c0_4 = arith.constant 0 : index
    %c0_5 = arith.constant 0 : index
    %7 = vector.load %arg3[%c0_4, %c0_5] : memref<1x256xf32, #tpu.memory_space<vmem>>, vector<1x256xf32>
    tpu.vector_store %arg3[%c0_4, %c0_5], %6 {strides = array<i32>} : memref<1x256xf32, #tpu.memory_space<vmem>>, vector<1x256xf32>,
    return
  }
  func.func @transform_0(%arg0: i32) -> (i32, i32) {
    %c0_i32 = arith.constant 0 : i32
    %c0_i32_0 = arith.constant 0 : i32
    %c0_i32_1 = arith.constant 0 : i32
    return %c0_i32, %c0_i32_0 : i32, i32
  }
  func.func @transform_1(%arg0: i32) -> (i32, i32) {
    %c0_i32 = arith.constant 0 : i32
    %c0_i32_0 = arith.constant 0 : i32
    %c0_i32_1 = arith.constant 0 : i32
    return %c0_i32, %c0_i32_0 : i32, i32
  }
  func.func @transform_2(%arg0: i32) -> (i32, i32) {
    %c0_i32 = arith.constant 0 : i32
    %c0_i32_0 = arith.constant 0 : i32
    %c0_i32_1 = arith.constant 0 : i32
    return %c0_i32, %c0_i32_0 : i32, i32
  }
}

</mosaic_0001>

<llo_original>
// kernel: tpu_custom_call.1
$region0: #{tpu_custom_call.1}
  #allocation0 [shape = 'u32[]', space=smem, size = 0x4, offset = 0x4, fixed_abs, tag = 'smem constant byte address 0x4 - core index']
  #allocation1 [shape = 'u32[72,128]{1,0:T(1,128)}', space=vmem, size = 0x9000, scoped, tag = 'internal scratch']
  #allocation2 [shape = 'f32[1,1]{1,0:T(1,128)S(6)}', space=smem, size = 0x200, scoped, tag = 'scoped memory for tpu_custom_call.1']
  %s0 = inlined_call_operand.<no memory space> [shape: f32[1,1], index: 0, kind: input, shape index: {}]
  %s1 = inlined_call_operand.vmem [shape: f32[1,256], index: 1, kind: input, shape index: {}]
  %s2 = inlined_call_operand.hbm [shape: f32[1,256], index: 2, kind: output, shape index: {}]
  %s3 = sld [smem:[#allocation0]]
  $region18: #{tpu_custom_call.1} parent=0
    _
  %s5 = ssub.s32 1, %s3
  %s6 = scalar_select 0, %s5, %s3
  %7 = sst [smem:[#allocation2]] %s0
  $region1: #{tpu_custom_call.1} parent=0
    #allocation3 [shape = 'u8[1024]{0}', space=vmem, size = 0x400, scoped, tag = 'output window, operand 0, single buffered']
    #allocation4 [shape = 's32[1]{0}', space=sflag, size = 0x4, scoped, tag = 'scoped memory for tpu_custom_call.1']
    %8 = vsyncpa [#allocation4], 0
    // Predicated region
    $region2: #{tpu_custom_call.1} parent=1 // pred_check
      _
    $region3: #{tpu_custom_call.1} parent=1 // pred_check_branch
      %10 = sbr.rel (0) target = $region5
    $region4: #{tpu_custom_call.1} parent=1 // pred_region
      _
    $region5: #{tpu_custom_call.1} parent=1 // pred_fallthru
      _
    // Predicated region
    $region6: #{tpu_custom_call.1} parent=1 // pred_check
      _
    $region7: #{tpu_custom_call.1} parent=1 // pred_check_branch
      %12 = sbr.rel (0) target = $region9
    $region8: #{tpu_custom_call.1} parent=1 // pred_region
      _
    $region9: #{tpu_custom_call.1} parent=1 // pred_fallthru
      _
    %s13 = sld [smem:[#allocation2]]
    %s14 = smax.f32 %s13, 0.0
    %s15 = smin.f32 %s14, 4.6052
    %v16 = vstv %s15
    %v17 = vmul.f32 %v16, 1.442695
    %v18 = vpow.pop %v17
    %s19 = vtos %v18
    %v20 = vld [vmem:[%s1] sm:$0x3]
    %v21 = vstv %s19
    %v22 = vmul.f32 %v20, %v21
    %v23 = vlaneseq
    %vm24 = vcmp.ge.s32.totalorder %v23, 0
    %vm25 = vcmp.lt.s32.totalorder %v23, 256
    %vm26 = vmand %vm24, %vm25
    %27 = vst.msk [vmem:[#allocation3] sm:$0x3] %vm26, %v22
    // Predicated region
    $region10: #{tpu_custom_call.1} parent=1 // pred_check
      _
    $region11: #{tpu_custom_call.1} parent=1 // pred_check_branch
      %29 = sbr.rel (0) target = $region13
    $region12: #{tpu_custom_call.1} parent=1 // pred_region
      %31 = vsyncadd [#allocation4], 0
      %s33 = sshll.u32 [#allocation3], 4
      %s34 = int_to_ptr.vmem [resolvable:$true] %s33
      %s35 = sshll.u32 %s2, 4
      %s36 = int_to_ptr.hbm [resolvable:$true] %s35
      %38 = dma.vmem_to_hbm [thread:$0]  %s34, 32, %s36, [#allocation4]
    $region13: #{tpu_custom_call.1} parent=1 // pred_fallthru
      _
    // Predicated region
    $region14: #{tpu_custom_call.1} parent=1 // pred_check
      _
    $region15: #{tpu_custom_call.1} parent=1 // pred_check_branch
      %40 = sbr.rel (0) target = $region17
    $region16: #{tpu_custom_call.1} parent=1 // pred_region
      %42 = dma.done [#allocation4], 32
    $region17: #{tpu_custom_call.1} parent=1 // pred_fallthru
      _
    %43 = vsyncpa [#allocation4], 1

</llo_original>
